<compile_context>
chip_gen: v6e
topology: v6e:2x2x1
jax: 0.10.0
libtpu: 0.0.40
codegen_flags: <defaults>
</compile_context>

<pallas_src>
import jax
import jax.numpy as jnp
from jax.experimental import pallas as pl
from jax.experimental.pallas import tpu as pltpu


def _round_up(x, m):
    return ((x + m - 1) // m) * m


def _temp_fusion_kernel(x_ref, wt_ref, b_ref, g_ref, avg_ref, o_ref):
    """One grid step == one tile of `bt` batch groups (bt*S matmul rows).

    x_ref  : (bt*S, 2H)  bf16  rows are (b, s) pairs, s fastest
    wt_ref : (2H, Cpad)  bf16  fc weight, pre-transposed, lane-padded
    b_ref  : (1, Cpad)   f32   fc bias, lane-padded
    g_ref  : (bt*S, 1)   f32   per-row gate w[s]
    avg_ref: (bt, bt*S)  f32   averaging matrix (1/S block pattern)
    o_ref  : (bt, Cpad)  f32   per-tile output (lane-dense)
    """
    # fc(x) for every (b, s) row in one MXU matmul, f32 accumulation.
    logits = jnp.dot(x_ref[...], wt_ref[...],
                     preferred_element_type=jnp.float32) + b_ref[...]
    # * w[s], then sigmoid (VPU/EUP, f32).
    act = jax.nn.sigmoid(logits * g_ref[...])
    # mean over the S rows of each batch group: one small MXU matmul.
    o_ref[...] = jnp.dot(avg_ref[...], act,
                         preferred_element_type=jnp.float32).astype(o_ref.dtype)


def temp_fusion_forward(x, w, fc_weight, fc_bias, *, compute_dtype=jnp.bfloat16):
    """x: (B, S, 2H)  w: (S,)  fc_weight: (C, 2H)  fc_bias: (C,)  ->  (B, C) f32."""
    B, S, D = x.shape
    C = fc_weight.shape[0]

    # ---- layout prep (contiguous / tiny ops; no transpose of x) ------------
    C_pad = _round_up(max(C, 128), 128)          # lane-dense output columns
    B_pad = _round_up(B, 8)                      # sublane-aligned batch groups

    # Batch-group tile: aim for ~512 matmul rows per grid step, multiple of 8,
    # and bt must divide B_pad.
    bt = max(8, _round_up(max(512 // S, 1), 8))
    bt = min(bt, B_pad)
    while B_pad % bt:
        bt -= 8
    grid_m = B_pad // bt

    x_pad = jnp.pad(x.astype(jnp.float32), ((0, B_pad - B), (0, 0), (0, 0)))
    x2d = x_pad.reshape(B_pad * S, D).astype(compute_dtype)        # (M, 2H)

    wt = jnp.zeros((D, C_pad), jnp.float32).at[:, :C].set(
        jnp.transpose(fc_weight).astype(jnp.float32)).astype(compute_dtype)
    b2 = jnp.zeros((1, C_pad), jnp.float32).at[0, :C].set(
        fc_bias.astype(jnp.float32))
    gate = jnp.tile(w.astype(jnp.float32), B_pad).reshape(B_pad * S, 1)

    # Per-tile averaging matrix: avg[g, g*S + s] = 1/S  (same for every tile).
    rows = jax.lax.broadcasted_iota(jnp.int32, (bt, bt * S), 0)
    cols = jax.lax.broadcasted_iota(jnp.int32, (bt, bt * S), 1)
    avg = jnp.where(cols // S == rows,
                    jnp.float32(1.0 / S), jnp.float32(0.0))

    grid_spec = pltpu.PrefetchScalarGridSpec(
        num_scalar_prefetch=0,
        grid=(grid_m,),
        in_specs=[
            pl.BlockSpec((bt * S, D), lambda i: (i, 0)),      # x rows of tile i
            pl.BlockSpec((D, C_pad), lambda i: (0, 0)),       # fc weight (resident)
            pl.BlockSpec((1, C_pad), lambda i: (0, 0)),       # fc bias (resident)
            pl.BlockSpec((bt * S, 1), lambda i: (i, 0)),      # per-row gate
            pl.BlockSpec((bt, bt * S), lambda i: (0, 0)),     # averaging matrix
        ],
        out_specs=pl.BlockSpec((bt, C_pad), lambda i: (i, 0)),
    )

    out_pad = pl.pallas_call(
        _temp_fusion_kernel,
        out_shape=jax.ShapeDtypeStruct((B_pad, C_pad), jnp.float32),
        grid_spec=grid_spec,
        compiler_params=pltpu.CompilerParams(
            # independent batch tiles -> both TensorCores on v7x; no reduction axis
            dimension_semantics=("parallel",),
        ),
    )(x2d, wt, b2, gate, avg)

    return out_pad[:B, :C]


def temp_fusion_reference(x, w, fc_weight, fc_bias, *, compute_dtype=jnp.float32):
    """Pure-JAX reference mirroring the PyTorch loop; compute_dtype mimics the
    MXU-input rounding of the kernel when set to bf16."""
    xc = x.astype(compute_dtype).astype(jnp.float32)
    wc = fc_weight.astype(compute_dtype).astype(jnp.float32)
    logits = jnp.einsum("bsd,cd->bsc", xc, wc) + fc_bias[None, None, :].astype(jnp.float32)
    gated = logits * w.astype(jnp.float32)[None, :, None]
    return jnp.mean(jax.nn.sigmoid(gated), axis=1)


if __name__ == "__main__":
    # Module hyperparameters (small, consistent with the forward pass).
    batch = 2
    seqlen = 8
    numhidden = 16          # fc input dim = numhidden * 2 = 32
    numclasses = 8

    key = jax.random.PRNGKey(0)
    k_x, k_w, k_b = jax.random.split(key, 3)

    # Deterministic parameter init (shapes per TempFusionLayer.__init__).
    w_param = jnp.ones((seqlen,), dtype=jnp.float32)                        # nn.Parameter(torch.ones(seqlen))
    fc_weight = 0.1 * jax.random.normal(k_w, (numclasses, numhidden * 2),   # nn.Linear weight (C, 2H)
                                        dtype=jnp.float32)
    fc_bias = 0.1 * jax.random.normal(k_b, (numclasses,), dtype=jnp.float32)

    x = jax.random.normal(k_x, (batch, seqlen, numhidden * 2), dtype=jnp.float32)

    out = temp_fusion_forward(x, w_param, fc_weight, fc_bias)
    out = jax.block_until_ready(out)
    assert out.shape == (batch, numclasses)

    # Tight check vs a reference with the same bf16 rounding of the MXU inputs.
    ref_bf16 = temp_fusion_reference(x, w_param, fc_weight, fc_bias,
                                     compute_dtype=jnp.bfloat16)
    assert jnp.allclose(out, ref_bf16, atol=1e-4, rtol=1e-4), (out, ref_bf16)

    # Loose check vs the exact f32 PyTorch-semantics reference.
    ref_f32 = temp_fusion_reference(x, w_param, fc_weight, fc_bias,
                                    compute_dtype=jnp.float32)
    assert jnp.allclose(out, ref_f32, atol=5e-3, rtol=5e-3), (out, ref_f32)

    print("KERNEL_OK")
</pallas_src>

<mosaic_0001>
module attributes {stable_mosaic.version = 11 : i64} {
  func.func @_temp_fusion_kernel(%arg0: i32, %arg1: memref<64x32xbf16, #tpu.memory_space<vmem>>, %arg2: memref<32x128xbf16, #tpu.memory_space<vmem>>, %arg3: memref<1x128xf32, #tpu.memory_space<vmem>>, %arg4: memref<64x1xf32, #tpu.memory_space<vmem>>, %arg5: memref<8x64xf32, #tpu.memory_space<vmem>>, %arg6: memref<8x128xf32, #tpu.memory_space<vmem>>) attributes {dimension_semantics = [#tpu.dimension_semantics<parallel>], iteration_bounds = array<i64: 1>, scalar_prefetch = 0 : i64, scratch_operands = 0 : i64, tpu.core_type = #tpu.core_type<tc>, window_params = [{transform_indices = @transform_0, window_bounds = array<i64: 64, 32>}, {pipeline_mode = #tpu.pipeline_mode<synchronous>, transform_indices = @transform_1, window_bounds = array<i64: 32, 128>}, {pipeline_mode = #tpu.pipeline_mode<synchronous>, transform_indices = @transform_2, window_bounds = array<i64: 1, 128>}, {transform_indices = @transform_3, window_bounds = array<i64: 64, 1>}, {pipeline_mode = #tpu.pipeline_mode<synchronous>, transform_indices = @transform_4, window_bounds = array<i64: 8, 64>}, {transform_indices = @transform_5, window_bounds = array<i64: 8, 128>}]} {
    %c0 = arith.constant 0 : index
    %c0_0 = arith.constant 0 : index
    %0 = vector.load %arg1[%c0, %c0_0] : memref<64x32xbf16, #tpu.memory_space<vmem>>, vector<64x32xbf16>
    %c0_1 = arith.constant 0 : index
    %c0_2 = arith.constant 0 : index
    %1 = vector.load %arg2[%c0_1, %c0_2] : memref<32x128xbf16, #tpu.memory_space<vmem>>, vector<32x128xbf16>
    %cst = arith.constant dense<0.000000e+00> : vector<64x128xf32>
    %2 = tpu.matmul %0, %1, %cst {dimension_numbers = #tpu.dot_dimension_numbers<[1], [0], [0], [1], [0, 0, 1, 1], [], []>} : vector<64x32xbf16>, vector<32x128xbf16>, vector<64x128xf32> -> vector<64x128xf32>
    %c0_3 = arith.constant 0 : index
    %c0_4 = arith.constant 0 : index
    %3 = vector.load %arg3[%c0_3, %c0_4] : memref<1x128xf32, #tpu.memory_space<vmem>>, vector<1x128xf32>
    %4 = vector.broadcast %3 : vector<1x128xf32> to vector<64x128xf32>
    %5 = arith.addf %2, %4 : vector<64x128xf32>
    %c0_5 = arith.constant 0 : index
    %c0_6 = arith.constant 0 : index
    %6 = vector.load %arg4[%c0_5, %c0_6] : memref<64x1xf32, #tpu.memory_space<vmem>>, vector<64x1xf32>
    %7 = vector.broadcast %6 : vector<64x1xf32> to vector<64x128xf32>
    %8 = arith.mulf %5, %7 : vector<64x128xf32>
    %9 = arith.negf %8 : vector<64x128xf32>
    %10 = math.exp %9 : vector<64x128xf32>
    %cst_7 = arith.constant 1.000000e+00 : f32
    %11 = vector.broadcast %cst_7 : f32 to vector<64x128xf32>
    %12 = arith.addf %11, %10 : vector<64x128xf32>
    %13 = arith.divf %11, %12 : vector<64x128xf32>
    %c0_8 = arith.constant 0 : index
    %c0_9 = arith.constant 0 : index
    %14 = vector.load %arg5[%c0_8, %c0_9] : memref<8x64xf32, #tpu.memory_space<vmem>>, vector<8x64xf32>
    %cst_10 = arith.constant dense<0.000000e+00> : vector<8x128xf32>
    %15 = tpu.matmul %14, %13, %cst_10 {dimension_numbers = #tpu.dot_dimension_numbers<[1], [0], [0], [1], [0, 0, 1, 1], [], []>} : vector<8x64xf32>, vector<64x128xf32>, vector<8x128xf32> -> vector<8x128xf32>
    %c0_11 = arith.constant 0 : index
    %c0_12 = arith.constant 0 : index
    %16 = vector.load %arg6[%c0_11, %c0_12] : memref<8x128xf32, #tpu.memory_space<vmem>>, vector<8x128xf32>
    tpu.vector_store %arg6[%c0_11, %c0_12], %15 {strides = array<i32>} : memref<8x128xf32, #tpu.memory_space<vmem>>, vector<8x128xf32>,
    return
  }
  func.func @transform_0(%arg0: i32) -> (i32, i32) {
    %c0_i32 = arith.constant 0 : i32
    %c0_i32_0 = arith.constant 0 : i32
    return %arg0, %c0_i32 : i32, i32
  }
  func.func @transform_1(%arg0: i32) -> (i32, i32) {
    %c0_i32 = arith.constant 0 : i32
    %c0_i32_0 = arith.constant 0 : i32
    %c0_i32_1 = arith.constant 0 : i32
    return %c0_i32, %c0_i32_0 : i32, i32
  }
  func.func @transform_2(%arg0: i32) -> (i32, i32) {
    %c0_i32 = arith.constant 0 : i32
    %c0_i32_0 = arith.constant 0 : i32
    %c0_i32_1 = arith.constant 0 : i32
    return %c0_i32, %c0_i32_0 : i32, i32
  }
  func.func @transform_3(%arg0: i32) -> (i32, i32) {
    %c0_i32 = arith.constant 0 : i32
    %c0_i32_0 = arith.constant 0 : i32
    return %arg0, %c0_i32 : i32, i32
  }
  func.func @transform_4(%arg0: i32) -> (i32, i32) {
    %c0_i32 = arith.constant 0 : i32
    %c0_i32_0 = arith.constant 0 : i32
    %c0_i32_1 = arith.constant 0 : i32
    return %c0_i32, %c0_i32_0 : i32, i32
  }
  func.func @transform_5(%arg0: i32) -> (i32, i32) {
    %c0_i32 = arith.constant 0 : i32
    %c0_i32_0 = arith.constant 0 : i32
    return %arg0, %c0_i32 : i32, i32
  }
}

</mosaic_0001>

<llo_original>
// kernel: tpu_custom_call.1
$region0: #{tpu_custom_call.1}
  #allocation0 [shape = 'u32[]', space=smem, size = 0x4, offset = 0x4, fixed_abs, tag = 'smem constant byte address 0x4 - core index']
  #allocation1 [shape = 'u32[144,128]{1,0:T(1,128)}', space=vmem, size = 0x12000, scoped, tag = 'internal scratch']
  %s0 = inlined_call_operand.vmem [shape: bf16[64,32], index: 0, kind: input, shape index: {}]
  %s1 = inlined_call_operand.vmem [shape: bf16[32,128], index: 1, kind: input, shape index: {}]
  %s2 = inlined_call_operand.vmem [shape: f32[1,128], index: 2, kind: input, shape index: {}]
  %s3 = inlined_call_operand.vmem [shape: f32[64,1], index: 3, kind: input, shape index: {}]
  %s4 = inlined_call_operand.vmem [shape: f32[8,64], index: 4, kind: input, shape index: {}]
  %s5 = inlined_call_operand.hbm [shape: f32[8,128], index: 5, kind: output, shape index: {}]
  %s6 = sld [smem:[#allocation0]]
  $region30: #{tpu_custom_call.1} parent=0
    _
  %s8 = ssub.s32 1, %s6
  %s9 = scalar_select 0, %s8, %s6
  $region1: #{tpu_custom_call.1} parent=0
    #allocation2 [shape = 'u8[4096]{0}', space=vmem, size = 0x1000, scoped, tag = 'output window, operand 0, single buffered']
    #allocation3 [shape = 's32[1]{0}', space=sflag, size = 0x4, scoped, tag = 'scoped memory for tpu_custom_call.1']
    %10 = vsyncpa [#allocation3], 0
    // Predicated region
    $region2: #{tpu_custom_call.1} parent=1 // pred_check
      _
    $region3: #{tpu_custom_call.1} parent=1 // pred_check_branch
      %12 = sbr.rel (0) target = $region5
    $region4: #{tpu_custom_call.1} parent=1 // pred_region
      _
    $region5: #{tpu_custom_call.1} parent=1 // pred_fallthru
      _
    // Predicated region
    $region6: #{tpu_custom_call.1} parent=1 // pred_check
      _
    $region7: #{tpu_custom_call.1} parent=1 // pred_check_branch
      %14 = sbr.rel (0) target = $region9
    $region8: #{tpu_custom_call.1} parent=1 // pred_region
      _
    $region9: #{tpu_custom_call.1} parent=1 // pred_fallthru
      _
    // Predicated region
    $region10: #{tpu_custom_call.1} parent=1 // pred_check
      _
    $region11: #{tpu_custom_call.1} parent=1 // pred_check_branch
      %16 = sbr.rel (0) target = $region13
    $region12: #{tpu_custom_call.1} parent=1 // pred_region
      _
    $region13: #{tpu_custom_call.1} parent=1 // pred_fallthru
      _
    // Predicated region
    $region14: #{tpu_custom_call.1} parent=1 // pred_check
      _
    $region15: #{tpu_custom_call.1} parent=1 // pred_check_branch
      %18 = sbr.rel (0) target = $region17
    $region16: #{tpu_custom_call.1} parent=1 // pred_region
      _
    $region17: #{tpu_custom_call.1} parent=1 // pred_fallthru
      _
    // Predicated region
    $region18: #{tpu_custom_call.1} parent=1 // pred_check
      _
    $region19: #{tpu_custom_call.1} parent=1 // pred_check_branch
      %20 = sbr.rel (0) target = $region21
    $region20: #{tpu_custom_call.1} parent=1 // pred_region
      _
    $region21: #{tpu_custom_call.1} parent=1 // pred_fallthru
      _
    %v22 = vld [vmem:[%s0] sm:$0xf]
    %v23 = vld [vmem:[%s0 + $0x4] sm:$0xf]
    %v24 = vld [vmem:[%s0 + $0x8] sm:$0xf]
    %v25 = vld [vmem:[%s0 + $0xc] sm:$0xf]
    %v26 = vld [vmem:[%s0 + $0x10] sm:$0xf]
    %v27 = vld [vmem:[%s0 + $0x14] sm:$0xf]
    %v28 = vld [vmem:[%s0 + $0x18] sm:$0xf]
    %v29 = vld [vmem:[%s0 + $0x1c] sm:$0xf]
    %v30 = vld [vmem:[%s1] sm:$0xf]
    %v31 = vld [vmem:[%s1 + $0x4] sm:$0xf]
    %v32 = vld [vmem:[%s1 + $0x8] sm:$0xf]
    %v33 = vld [vmem:[%s1 + $0xc] sm:$0xf]
    %v34 = vld [vmem:[%s2] sm:$0x1]
    %v36 = vlaneseq
    %v37 = vshrl.u32 %v36, 7
    %v38 = vsub.s32 0, %v37
    %v39 = vrot.slane %v34, %v38
    %v49 = vunpack.c.l.b16 %v22
    %v50 = vunpack.c.l.b16 %v23
    %v51 = vunpack.c.l.b16 %v24
    %v52 = vunpack.c.l.b16 %v25
    %v53 = vunpack.c.l.b16 %v26
    %v54 = vunpack.c.l.b16 %v27
    %v55 = vunpack.c.l.b16 %v28
    %v56 = vunpack.c.l.b16 %v29
    %v57 = vpack.c.b16 %v50, %v49
    %v58 = vpack.c.b16 %v52, %v51
    %v59 = vpack.c.b16 %v54, %v53
    %v60 = vpack.c.b16 %v56, %v55
    %v65 = vunpack.c.l.b16 %v30
    %v66 = vunpack.c.l.b16 %v31
    %v67 = vunpack.c.l.b16 %v32
    %v68 = vunpack.c.l.b16 %v33
    %v69 = vpack.c.b16 %v66, %v65
    %v70 = vpack.c.b16 %v68, %v67
    %vm73 = vcmask 261120
    %v75 = vsel %vm73, %v57, 0
    %v78 = vsel %vm73, %v58, 0
    %v81 = vsel %vm73, %v59, 0
    %v84 = vsel %vm73, %v60, 0
    %86 = vmatprep.subr.bf16.mxu0 0
    %87 = vmatpush1.bf16.msra.mxu0 0
    %88 = vmatprep.subr.bf16.mxu0 0
    %89 = vmatpush1.bf16.msra.mxu0 0
    %90 = vmatprep.subr.bf16.mxu0 0
    %91 = vmatpush1.bf16.msra.mxu0 0
    %92 = vmatprep.subr.bf16.mxu0 0
    %93 = vmatpush1.bf16.msra.mxu0 0
    %94 = vmatprep.subr.bf16.mxu0 0
    %95 = vmatpush1.bf16.msra.mxu0 0
    %96 = vmatprep.subr.bf16.mxu0 0
    %97 = vmatpush1.bf16.msra.mxu0 0
    %98 = vmatprep.subr.bf16.mxu0 0
    %99 = vmatpush1.bf16.msra.mxu0 %v70
    %100 = vmatprep.subr.bf16.mxu0 0
    %101 = vmatpush1.bf16.msra.mxu0 %v69
    %102 = vmatprep.subr.bf16.mxu0 0
    %103 = vmatpush2.bf16.msra.mxu0 0
    %104 = vmatprep.subr.bf16.mxu0 0
    %105 = vmatpush2.bf16.msra.mxu0 0
    %106 = vmatprep.subr.bf16.mxu0 0
    %107 = vmatpush2.bf16.msra.mxu0 0
    %108 = vmatprep.subr.bf16.mxu0 0
    %109 = vmatpush2.bf16.msra.mxu0 0
    %110 = vmatprep.subr.bf16.mxu0 0
    %111 = vmatpush2.bf16.msra.mxu0 0
    %112 = vmatprep.subr.bf16.mxu0 0
    %113 = vmatpush2.bf16.msra.mxu0 0
    %114 = vmatprep.subr.bf16.mxu0 0
    %115 = vmatpush2.bf16.msra.mxu0 0
    %116 = vmatprep.subr.bf16.mxu0 0
    %117 = vmatpush2.bf16.msra.mxu0 0
    %118 = vmatprep.mubr.bf16.mxu0 0
    %119 = vmatmul.mubr.bf16.gmra.mxu0 %v75
    %v120 = vpop.f32.mrf.mxu0
    %v121 = vadd.f32 %v39, %v120
    %v122 = vpop.f32.mrf.mxu0
    %v123 = vpop.f32.mrf.mxu0
    %v124 = vadd.f32 %v39, %v123
    %v125 = vpop.f32.mrf.mxu0
    %126 = vmatprep.mubr.bf16.mxu0 0
    %127 = vmatmul.mubr.bf16.gmra.mxu0 %v78
    %v128 = vpop.f32.mrf.mxu0
    %v129 = vadd.f32 %v39, %v128
    %v130 = vpop.f32.mrf.mxu0
    %v131 = vpop.f32.mrf.mxu0
    %v132 = vadd.f32 %v39, %v131
    %v133 = vpop.f32.mrf.mxu0
    %134 = vmatprep.mubr.bf16.mxu0 0
    %135 = vmatmul.mubr.bf16.gmra.mxu0 %v81
    %v136 = vpop.f32.mrf.mxu0
    %v137 = vadd.f32 %v39, %v136
    %v138 = vpop.f32.mrf.mxu0
    %v139 = vpop.f32.mrf.mxu0
    %v140 = vadd.f32 %v39, %v139
    %v141 = vpop.f32.mrf.mxu0
    %142 = vmatprep.mubr.bf16.mxu0 0
    %143 = vmatmul.mubr.bf16.gmra.mxu0 %v84
    %v144 = vpop.f32.mrf.mxu0
    %v145 = vadd.f32 %v39, %v144
    %v146 = vpop.f32.mrf.mxu0
    %v147 = vpop.f32.mrf.mxu0
    %v148 = vadd.f32 %v39, %v147
    %v149 = vpop.f32.mrf.mxu0
    %150 = vdwg.mxu0
    %v151 = vld [vmem:[%s3] sm:$0xff]
    %v152 = vld [vmem:[%s3 + $0x8] sm:$0xff]
    %v153 = vld [vmem:[%s3 + $0x10] sm:$0xff]
    %v154 = vld [vmem:[%s3 + $0x18] sm:$0xff]
    %v155 = vld [vmem:[%s3 + $0x20] sm:$0xff]
    %v156 = vld [vmem:[%s3 + $0x28] sm:$0xff]
    %v157 = vld [vmem:[%s3 + $0x30] sm:$0xff]
    %v158 = vld [vmem:[%s3 + $0x38] sm:$0xff]
    %160 = vset.pattern.permute.xlu0 0
    %161 = vperm.xlu0 %160, %v151
    %v162 = vpop.permute.xlu0 %161
    %165 = vset.pattern.permute.xlu0 0
    %166 = vperm.xlu0 %165, %v152
    %v167 = vpop.permute.xlu0 %166
    %170 = vset.pattern.permute.xlu0 0
    %171 = vperm.xlu0 %170, %v153
    %v172 = vpop.permute.xlu0 %171
    %175 = vset.pattern.permute.xlu0 0
    %176 = vperm.xlu0 %175, %v154
    %v177 = vpop.permute.xlu0 %176
    %180 = vset.pattern.permute.xlu0 0
    %181 = vperm.xlu0 %180, %v155
    %v182 = vpop.permute.xlu0 %181
    %185 = vset.pattern.permute.xlu0 0
    %186 = vperm.xlu0 %185, %v156
    %v187 = vpop.permute.xlu0 %186
    %190 = vset.pattern.permute.xlu0 0
    %191 = vperm.xlu0 %190, %v157
    %v192 = vpop.permute.xlu0 %191
    %195 = vset.pattern.permute.xlu0 0
    %196 = vperm.xlu0 %195, %v158
    %v197 = vpop.permute.xlu0 %196
    %v199 = vmul.f32 %v121, %v162
    %v200 = vmul.f32 %v124, %v167
    %v201 = vmul.f32 %v129, %v172
    %v202 = vmul.f32 %v132, %v177
    %v203 = vmul.f32 %v137, %v182
    %v204 = vmul.f32 %v140, %v187
    %v205 = vmul.f32 %v145, %v192
    %v206 = vmul.f32 %v148, %v197
    %v207 = vxor.u32 %v199, 2147483648
    %v208 = vxor.u32 %v200, 2147483648
    %v209 = vxor.u32 %v201, 2147483648
    %v210 = vxor.u32 %v202, 2147483648
    %v211 = vxor.u32 %v203, 2147483648
    %v212 = vxor.u32 %v204, 2147483648
    %v213 = vxor.u32 %v205, 2147483648
    %v214 = vxor.u32 %v206, 2147483648
    %v215 = vmul.f32 %v207, 1.442695
    %v216 = vpow.pop %v215
    %v217 = vmul.f32 %v208, 1.442695
    %v218 = vpow.pop %v217
    %v219 = vmul.f32 %v209, 1.442695
    %v220 = vpow.pop %v219
    %v221 = vmul.f32 %v210, 1.442695
    %v222 = vpow.pop %v221
    %v223 = vmul.f32 %v211, 1.442695
    %v224 = vpow.pop %v223
    %v225 = vmul.f32 %v212, 1.442695
    %v226 = vpow.pop %v225
    %v227 = vmul.f32 %v213, 1.442695
    %v228 = vpow.pop %v227
    %v229 = vmul.f32 %v214, 1.442695
    %v230 = vpow.pop %v229
    %v231 = vadd.f32 %v216, 1.0
    %v232 = vadd.f32 %v218, 1.0
    %v233 = vadd.f32 %v220, 1.0
    %v234 = vadd.f32 %v222, 1.0
    %v235 = vadd.f32 %v224, 1.0
    %v236 = vadd.f32 %v226, 1.0
    %v237 = vadd.f32 %v228, 1.0
    %v238 = vadd.f32 %v230, 1.0
    %v239 = vrcp.pop %v231
    %v240 = vmul.f32 1.0, %v239
    %v241 = vrcp.pop %v232
    %v242 = vmul.f32 1.0, %v241
    %v243 = vrcp.pop %v233
    %v244 = vmul.f32 1.0, %v243
    %v245 = vrcp.pop %v234
    %v246 = vmul.f32 1.0, %v245
    %v247 = vrcp.pop %v235
    %v248 = vmul.f32 1.0, %v247
    %v249 = vrcp.pop %v236
    %v250 = vmul.f32 1.0, %v249
    %v251 = vrcp.pop %v237
    %v252 = vmul.f32 1.0, %v251
    %v253 = vrcp.pop %v238
    %v254 = vmul.f32 1.0, %v253
    %v255 = vld [vmem:[%s4] sm:$0xff]
    %vm256 = vcmask 523264
    %v258 = vsel %vm256, %v255, 0
    %260 = vmatprep.subr.mxu0 0.0
    %261 = vmatpush1.msra.mxu0 0.0
    %262 = vmatprep.subr.mxu0 0.0
    %263 = vmatpush1.msra.mxu0 0.0
    %264 = vmatprep.subr.mxu0 0.0
    %265 = vmatpush1.msra.mxu0 0.0
    %266 = vmatprep.subr.mxu0 0.0
    %267 = vmatpush1.msra.mxu0 0.0
    %268 = vmatprep.subr.mxu0 0.0
    %269 = vmatpush1.msra.mxu0 0.0
    %270 = vmatprep.subr.mxu0 0.0
    %271 = vmatpush1.msra.mxu0 0.0
    %272 = vmatprep.subr.mxu0 0.0
    %273 = vmatpush1.msra.mxu0 0.0
    %274 = vmatprep.subr.mxu0 0.0
    %275 = vmatpush1.msra.mxu0 0.0
    %276 = vmatprep.subr.mxu0 0.0
    %277 = vmatpush1.msra.mxu0 %v254
    %278 = vmatprep.subr.mxu0 0.0
    %279 = vmatpush1.msra.mxu0 %v252
    %280 = vmatprep.subr.mxu0 0.0
    %281 = vmatpush1.msra.mxu0 %v250
    %282 = vmatprep.subr.mxu0 0.0
    %283 = vmatpush1.msra.mxu0 %v248
    %284 = vmatprep.subr.mxu0 0.0
    %285 = vmatpush1.msra.mxu0 %v246
    %286 = vmatprep.subr.mxu0 0.0
    %287 = vmatpush1.msra.mxu0 %v244
    %288 = vmatprep.subr.mxu0 0.0
    %289 = vmatpush1.msra.mxu0 %v242
    %290 = vmatprep.subr.mxu0 0.0
    %291 = vmatpush1.msra.mxu0 %v240
    %292 = vmatprep.subr.mxu0 0.0
    %293 = vmatpush2.msra.mxu0 0.0
    %294 = vmatprep.subr.mxu0 0.0
    %295 = vmatpush2.msra.mxu0 0.0
    %296 = vmatprep.subr.mxu0 0.0
    %297 = vmatpush2.msra.mxu0 0.0
    %298 = vmatprep.subr.mxu0 0.0
    %299 = vmatpush2.msra.mxu0 0.0
    %300 = vmatprep.subr.mxu0 0.0
    %301 = vmatpush2.msra.mxu0 0.0
    %302 = vmatprep.subr.mxu0 0.0
    %303 = vmatpush2.msra.mxu0 0.0
    %304 = vmatprep.subr.mxu0 0.0
    %305 = vmatpush2.msra.mxu0 0.0
    %306 = vmatprep.subr.mxu0 0.0
    %307 = vmatpush2.msra.mxu0 0.0
    %308 = vmatprep.subr.mxu0 0.0
    %309 = vmatpush2.msra.mxu0 0.0
    %310 = vmatprep.subr.mxu0 0.0
    %311 = vmatpush2.msra.mxu0 0.0
    %312 = vmatprep.subr.mxu0 0.0
    %313 = vmatpush2.msra.mxu0 0.0
    %314 = vmatprep.subr.mxu0 0.0
    %315 = vmatpush2.msra.mxu0 0.0
    %316 = vmatprep.subr.mxu0 0.0
    %317 = vmatpush2.msra.mxu0 0.0
    %318 = vmatprep.subr.mxu0 0.0
    %319 = vmatpush2.msra.mxu0 0.0
    %320 = vmatprep.subr.mxu0 0.0
    %321 = vmatpush2.msra.mxu0 0.0
    %322 = vmatprep.subr.mxu0 0.0
    %323 = vmatpush2.msra.mxu0 0.0
    %324 = vmatprep.mubr.f32.mxu0 0.0
    %325 = vmatmul.mubr.f32.gmra.mxu0 %v258
    %v326 = vpop.f32.mrf.mxu0
    %v327 = vadd.f32 0.0, %v326
    %v328 = vpop.f32.mrf.mxu0
    %329 = vdwg.mxu0
    %330 = vst [vmem:[#allocation2] sm:$0xff] %v327
    // Predicated region
    $region22: #{tpu_custom_call.1} parent=1 // pred_check
      _
    $region23: #{tpu_custom_call.1} parent=1 // pred_check_branch
      %332 = sbr.rel (0) target = $region25
    $region24: #{tpu_custom_call.1} parent=1 // pred_region
      %s334 = ssub.s32 128, 128
      %335 = vsyncadd [#allocation3], %s334
      %s337 = sshll.u32 [#allocation2], 4
      %s338 = int_to_ptr.vmem [resolvable:$true] %s337
      %340 = dma.vmem_to_hbm [thread:$0]  %s338, 128, %s5, [#allocation3]
    $region25: #{tpu_custom_call.1} parent=1 // pred_fallthru
      _
    // Predicated region
    $region26: #{tpu_custom_call.1} parent=1 // pred_check
      _
    $region27: #{tpu_custom_call.1} parent=1 // pred_check_branch
      %342 = sbr.rel (0) target = $region29
    $region28: #{tpu_custom_call.1} parent=1 // pred_region
      %343 = dma.done [#allocation3], 128
    $region29: #{tpu_custom_call.1} parent=1 // pred_fallthru
      _
    %344 = vsyncpa [#allocation3], 1

</llo_original>
